<compile_context>
chip_gen: v5e
topology: v5e:2x2
jax: 0.10.0
libtpu: 0.0.40
codegen_flags: <defaults>
</compile_context>

<pallas_src>
import functools

import jax
import jax.numpy as jnp
from jax.experimental import pallas as pl
from jax.experimental.pallas import tpu as pltpu


def _dilate_conv_kernel(x_ref, w_ref, b_ref, o_ref, col_ref, *, H, W, d_rate, cin):
    """One batch element per grid step.

    x_ref   : (1, Cin, H*W)   unpadded, lane-dense flat input
    w_ref   : (Cout, 9*Cin)   tap-major weights (tap = kh*3 + kw)
    b_ref   : (Cout, 1)       bias (f32)
    o_ref   : (1, Cout, H*W)  lane-dense output tile
    col_ref : (9*Cin, H*W)    im2col VMEM scratch -> one fused MXU dot
    """
    HW = H * W

    # Static column index of every flattened output position — only needed for
    # the kw=0 / kw=2 taps (left/right zero-padding columns).  The kh=0 / kh=2
    # (top/bottom) padding is handled by the zero fill of the shifted patches.
    col = jax.lax.broadcasted_iota(jnp.int32, (1, HW), 1) % W
    left_valid = col >= d_rate            # kw == 0 : reads x[.., w - d]
    right_valid = col < (W - d_rate)      # kw == 2 : reads x[.., w + d]

    # Build the im2col matrix: row block `tap` holds, for every output
    # position p, the (zero-padded) input value that tap (kh, kw) reads.
    for kh in range(3):
        for kw in range(3):
            tap = kh * 3 + kw
            # Output position p reads flat input position p + off.
            off = d_rate * ((kh - 1) * W + (kw - 1))      # static python int
            n = HW - abs(off)
            if n <= 0:                                     # degenerate d_rate
                src = jnp.zeros((cin, HW), col_ref.dtype)
            elif off > 0:
                body = x_ref[0, :, off:off + n]            # (Cin, n)
                src = jnp.concatenate(
                    [body, jnp.zeros((cin, HW - n), col_ref.dtype)], axis=1)
            elif off < 0:
                body = x_ref[0, :, 0:n]                    # (Cin, n)
                src = jnp.concatenate(
                    [jnp.zeros((cin, HW - n), col_ref.dtype), body], axis=1)
            else:
                src = x_ref[0]                             # (Cin, HW)
            # W-direction zero padding (kills row wraps in the flat index).
            if kw == 0:
                src = jnp.where(left_valid, src, 0.0)
            elif kw == 2:
                src = jnp.where(right_valid, src, 0.0)
            col_ref[tap * cin:(tap + 1) * cin, :] = src

    # Single fused MXU contraction over K = 9*Cin, f32 accumulation,
    # bias add, and one lane-dense writeback.
    acc = jnp.dot(w_ref[...], col_ref[...], preferred_element_type=jnp.float32)
    acc = acc + b_ref[...].astype(jnp.float32)
    o_ref[0] = acc.astype(o_ref.dtype)


def dilate_conv(x_nchw, weight, bias, d_rate, *, compute_dtype=None):
    """Forward pass of DilateConv.

    x_nchw : (N, Cin, H, W)     (PyTorch layout, kept as-is)
    weight : (Cout, Cin, 3, 3)  (PyTorch Conv2d OIHW layout)
    bias   : (Cout,)
    compute_dtype : optional dtype for activations/weights at the kernel
                    boundary (e.g. jnp.bfloat16 on v6e/v7x); accumulation and
                    the returned output stay in the input dtype's precision.
    returns (N, Cout, H, W)
    """
    N, Cin, H, W = x_nchw.shape
    Cout = weight.shape[0]
    HW = H * W

    out_dtype = x_nchw.dtype
    if compute_dtype is not None:
        x_nchw = x_nchw.astype(compute_dtype)
        weight = weight.astype(compute_dtype)
    cdtype = x_nchw.dtype

    # (N, Cin, H, W) -> (N, Cin, H*W): contiguous reshape, free (no HBM copy).
    x_flat = x_nchw.reshape(N, Cin, HW)

    # OIHW -> (Cout, 9*Cin), tap-major: column index = (kh*3 + kw)*Cin + c.
    w2 = jnp.transpose(weight, (0, 2, 3, 1)).reshape(Cout, 9 * Cin)
    b2 = bias.reshape(Cout, 1).astype(jnp.float32)

    kernel = functools.partial(_dilate_conv_kernel,
                               H=H, W=W, d_rate=d_rate, cin=Cin)

    itemsize = jnp.dtype(cdtype).itemsize
    out_itemsize = jnp.dtype(out_dtype).itemsize
    flops = 2 * N * HW * 9 * Cin * Cout
    bytes_accessed = (N * Cin * HW * itemsize
                      + Cout * 9 * Cin * itemsize
                      + Cout * 4
                      + N * Cout * HW * out_itemsize)

    # Working set per grid step (input/output blocks are double-buffered by
    # the pipeline) with 2x headroom, capped below v7x's 64 MiB physical VMEM.
    working_set = (2 * Cin * HW * itemsize
                   + 2 * Cout * HW * out_itemsize
                   + Cout * 9 * Cin * itemsize + Cout * 4
                   + 9 * Cin * HW * itemsize)
    vmem_limit = int(min(max(2 * working_set, 32 * 1024 * 1024),
                         64 * 1024 * 1024))

    out_flat = pl.pallas_call(
        kernel,
        out_shape=jax.ShapeDtypeStruct((N, Cout, HW), out_dtype),
        grid=(N,),
        in_specs=[
            pl.BlockSpec((1, Cin, HW), lambda n: (n, 0, 0)),
            pl.BlockSpec((Cout, 9 * Cin), lambda n: (0, 0)),
            pl.BlockSpec((Cout, 1), lambda n: (0, 0)),
        ],
        out_specs=pl.BlockSpec((1, Cout, HW), lambda n: (n, 0, 0)),
        scratch_shapes=[pltpu.VMEM((9 * Cin, HW), cdtype)],
        compiler_params=pltpu.CompilerParams(
            dimension_semantics=("parallel",),
            vmem_limit_bytes=vmem_limit,
        ),
        cost_estimate=pl.CostEstimate(
            flops=flops, transcendentals=0, bytes_accessed=bytes_accessed),
    )(x_flat, w2, b2)

    # (N, Cout, H*W) -> (N, Cout, H, W): contiguous reshape, free.
    return out_flat.reshape(N, Cout, H, W)


def _reference(x_nchw, weight, bias, d_rate):
    """Pure-JAX reference (matches torch.nn.Conv2d semantics)."""
    out = jax.lax.conv_general_dilated(
        x_nchw, weight,
        window_strides=(1, 1),
        padding=((d_rate, d_rate), (d_rate, d_rate)),
        rhs_dilation=(d_rate, d_rate),
        dimension_numbers=("NCHW", "OIHW", "NCHW"),
    )
    return out + bias.reshape(1, -1, 1, 1)


if __name__ == "__main__":
    # Small, deterministic example consistent with the module's forward.
    d_rate, in_ch, out_ch = 2, 4, 8
    N, H, W = 2, 16, 16

    key = jax.random.PRNGKey(0)
    kx, kw, kb = jax.random.split(key, 3)

    x = jax.random.normal(kx, (N, in_ch, H, W), dtype=jnp.float32)
    # Deterministic parameter init (kaiming-uniform-like scale for a 3x3 conv).
    fan_in = in_ch * 3 * 3
    bound = 1.0 / jnp.sqrt(fan_in)
    weight = jax.random.uniform(kw, (out_ch, in_ch, 3, 3),
                                minval=-bound, maxval=bound,
                                dtype=jnp.float32)
    bias = jax.random.uniform(kb, (out_ch,), minval=-bound, maxval=bound,
                              dtype=jnp.float32)

    out = dilate_conv(x, weight, bias, d_rate)
    out = jax.block_until_ready(out)

    ref = _reference(x, weight, bias, d_rate)
    assert out.shape == (N, out_ch, H, W)
    assert jnp.allclose(out, ref, atol=1e-4, rtol=1e-4), "mismatch vs reference"

    print("KERNEL_OK")
</pallas_src>

<mosaic_0001>
module attributes {stable_mosaic.version = 11 : i64} {
  func.func @_dilate_conv_kernel(%arg0: i32, %arg1: memref<1x4x256xf32, #tpu.memory_space<vmem>>, %arg2: memref<8x36xf32, #tpu.memory_space<vmem>>, %arg3: memref<8x1xf32, #tpu.memory_space<vmem>>, %arg4: memref<1x8x256xf32, #tpu.memory_space<vmem>>, %arg5: memref<36x256xf32, #tpu.memory_space<vmem>>) attributes {dimension_semantics = [#tpu.dimension_semantics<parallel>], iteration_bounds = array<i64: 2>, scalar_prefetch = 0 : i64, scratch_operands = 1 : i64, tpu.core_type = #tpu.core_type<tc>, window_params = [{transform_indices = @transform_0, window_bounds = array<i64: 1, 4, 256>}, {pipeline_mode = #tpu.pipeline_mode<synchronous>, transform_indices = @transform_1, window_bounds = array<i64: 8, 36>}, {pipeline_mode = #tpu.pipeline_mode<synchronous>, transform_indices = @transform_2, window_bounds = array<i64: 8, 1>}, {transform_indices = @transform_3, window_bounds = array<i64: 1, 8, 256>}]} {
    %0 = tpu.iota {dimensions = array<i32: 1>} : vector<1x256xi32>
    %c16_i32 = arith.constant 16 : i32
    %c0_i32 = arith.constant 0 : i32
    %1 = arith.cmpi eq, %c16_i32, %c0_i32 : i32
    %c1_i32 = arith.constant 1 : i32
    %2 = arith.select %1, %c1_i32, %c16_i32 : i32
    %3 = vector.broadcast %2 : i32 to vector<1x256xi32>
    %4 = arith.remsi %0, %3 : vector<1x256xi32>
    %c0_i32_0 = arith.constant 0 : i32
    %5 = vector.broadcast %c0_i32_0 : i32 to vector<1x256xi32>
    %6 = arith.cmpi ne, %4, %5 : vector<1x256xi32>
    %c0_i32_1 = arith.constant 0 : i32
    %7 = vector.broadcast %c0_i32_1 : i32 to vector<1x256xi32>
    %8 = arith.cmpi slt, %4, %7 : vector<1x256xi32>
    %c0_i32_2 = arith.constant 0 : i32
    %9 = arith.cmpi slt, %2, %c0_i32_2 : i32
    %10 = vector.broadcast %9 : i1 to vector<1x256xi1>
    %11 = vector.broadcast %10 : vector<1x256xi1> to vector<1x256xi1>
    %12 = arith.xori %8, %11 : vector<1x256xi1>
    %13 = arith.andi %12, %6 : vector<1x256xi1>
    %14 = vector.broadcast %2 : i32 to vector<1x256xi32>
    %15 = arith.addi %4, %14 : vector<1x256xi32>
    %16 = arith.select %13, %15, %4 : vector<1x256xi1>, vector<1x256xi32>
    %c2_i32 = arith.constant 2 : i32
    %17 = vector.broadcast %c2_i32 : i32 to vector<1x256xi32>
    %18 = arith.cmpi sge, %16, %17 : vector<1x256xi32>
    %c14_i32 = arith.constant 14 : i32
    %19 = vector.broadcast %c14_i32 : i32 to vector<1x256xi32>
    %20 = arith.cmpi slt, %16, %19 : vector<1x256xi32>
    %c0 = arith.constant 0 : index
    %c0_3 = arith.constant 0 : index
    %c0_4 = arith.constant 0 : index
    %21 = vector.load %arg1[%c0, %c0_3, %c0_4] : memref<1x4x256xf32, #tpu.memory_space<vmem>>, vector<1x4x222xf32>
    %22 = vector.shape_cast %21 : vector<1x4x222xf32> to vector<4x222xf32>
    %cst = arith.constant 0.000000e+00 : f32
    %23 = vector.broadcast %cst : f32 to vector<4x34xf32>
    %24 = tpu.concatenate %23, %22 in 1 : vector<4x34xf32>, vector<4x222xf32> -> vector<4x256xf32>
    %cst_5 = arith.constant 0.000000e+00 : f32
    %25 = vector.shape_cast %18 : vector<1x256xi1> to vector<1x256xi1>
    %26 = vector.broadcast %25 : vector<1x256xi1> to vector<4x256xi1>
    %27 = vector.broadcast %cst_5 : f32 to vector<4x256xf32>
    %28 = arith.select %26, %24, %27 : vector<4x256xi1>, vector<4x256xf32>
    %c0_6 = arith.constant 0 : index
    %c0_7 = arith.constant 0 : index
    %29 = vector.load %arg5[%c0_6, %c0_7] : memref<36x256xf32, #tpu.memory_space<vmem>>, vector<4x256xf32>
    tpu.vector_store %arg5[%c0_6, %c0_7], %28 {strides = array<i32>} : memref<36x256xf32, #tpu.memory_space<vmem>>, vector<4x256xf32>,
    %c0_8 = arith.constant 0 : index
    %c0_9 = arith.constant 0 : index
    %c0_10 = arith.constant 0 : index
    %30 = vector.load %arg1[%c0_8, %c0_9, %c0_10] : memref<1x4x256xf32, #tpu.memory_space<vmem>>, vector<1x4x224xf32>
    %31 = vector.shape_cast %30 : vector<1x4x224xf32> to vector<4x224xf32>
    %cst_11 = arith.constant 0.000000e+00 : f32
    %32 = vector.broadcast %cst_11 : f32 to vector<4x32xf32>
    %33 = tpu.concatenate %32, %31 in 1 : vector<4x32xf32>, vector<4x224xf32> -> vector<4x256xf32>
    %c4 = arith.constant 4 : index
    %c0_12 = arith.constant 0 : index
    %34 = vector.load %arg5[%c4, %c0_12] : memref<36x256xf32, #tpu.memory_space<vmem>>, vector<4x256xf32>
    tpu.vector_store %arg5[%c4, %c0_12], %33 {strides = array<i32>} : memref<36x256xf32, #tpu.memory_space<vmem>>, vector<4x256xf32>,
    %c0_13 = arith.constant 0 : index
    %c0_14 = arith.constant 0 : index
    %c0_15 = arith.constant 0 : index
    %35 = vector.load %arg1[%c0_13, %c0_14, %c0_15] : memref<1x4x256xf32, #tpu.memory_space<vmem>>, vector<1x4x226xf32>
    %36 = vector.shape_cast %35 : vector<1x4x226xf32> to vector<4x226xf32>
    %cst_16 = arith.constant 0.000000e+00 : f32
    %37 = vector.broadcast %cst_16 : f32 to vector<4x30xf32>
    %38 = tpu.concatenate %37, %36 in 1 : vector<4x30xf32>, vector<4x226xf32> -> vector<4x256xf32>
    %cst_17 = arith.constant 0.000000e+00 : f32
    %39 = vector.shape_cast %20 : vector<1x256xi1> to vector<1x256xi1>
    %40 = vector.broadcast %39 : vector<1x256xi1> to vector<4x256xi1>
    %41 = vector.broadcast %cst_17 : f32 to vector<4x256xf32>
    %42 = arith.select %40, %38, %41 : vector<4x256xi1>, vector<4x256xf32>
    %c8 = arith.constant 8 : index
    %c0_18 = arith.constant 0 : index
    %43 = vector.load %arg5[%c8, %c0_18] : memref<36x256xf32, #tpu.memory_space<vmem>>, vector<4x256xf32>
    tpu.vector_store %arg5[%c8, %c0_18], %42 {strides = array<i32>} : memref<36x256xf32, #tpu.memory_space<vmem>>, vector<4x256xf32>,
    %c0_19 = arith.constant 0 : index
    %c0_20 = arith.constant 0 : index
    %c0_21 = arith.constant 0 : index
    %44 = vector.load %arg1[%c0_19, %c0_20, %c0_21] : memref<1x4x256xf32, #tpu.memory_space<vmem>>, vector<1x4x254xf32>
    %45 = vector.shape_cast %44 : vector<1x4x254xf32> to vector<4x254xf32>
    %cst_22 = arith.constant 0.000000e+00 : f32
    %46 = vector.broadcast %cst_22 : f32 to vector<4x2xf32>
    %47 = tpu.concatenate %46, %45 in 1 : vector<4x2xf32>, vector<4x254xf32> -> vector<4x256xf32>
    %cst_23 = arith.constant 0.000000e+00 : f32
    %48 = vector.shape_cast %18 : vector<1x256xi1> to vector<1x256xi1>
    %49 = vector.broadcast %48 : vector<1x256xi1> to vector<4x256xi1>
    %50 = vector.broadcast %cst_23 : f32 to vector<4x256xf32>
    %51 = arith.select %49, %47, %50 : vector<4x256xi1>, vector<4x256xf32>
    %c12 = arith.constant 12 : index
    %c0_24 = arith.constant 0 : index
    %52 = vector.load %arg5[%c12, %c0_24] : memref<36x256xf32, #tpu.memory_space<vmem>>, vector<4x256xf32>
    tpu.vector_store %arg5[%c12, %c0_24], %51 {strides = array<i32>} : memref<36x256xf32, #tpu.memory_space<vmem>>, vector<4x256xf32>,
    %c0_25 = arith.constant 0 : index
    %c0_26 = arith.constant 0 : index
    %c0_27 = arith.constant 0 : index
    %53 = vector.load %arg1[%c0_25, %c0_26, %c0_27] : memref<1x4x256xf32, #tpu.memory_space<vmem>>, vector<1x4x256xf32>
    %54 = vector.shape_cast %53 : vector<1x4x256xf32> to vector<4x256xf32>
    %c16 = arith.constant 16 : index
    %c0_28 = arith.constant 0 : index
    %55 = vector.load %arg5[%c16, %c0_28] : memref<36x256xf32, #tpu.memory_space<vmem>>, vector<4x256xf32>
    tpu.vector_store %arg5[%c16, %c0_28], %54 {strides = array<i32>} : memref<36x256xf32, #tpu.memory_space<vmem>>, vector<4x256xf32>,
    %c0_29 = arith.constant 0 : index
    %c0_30 = arith.constant 0 : index
    %c2 = arith.constant 2 : index
    %56 = vector.load %arg1[%c0_29, %c0_30, %c2] : memref<1x4x256xf32, #tpu.memory_space<vmem>>, vector<1x4x254xf32>
    %57 = vector.shape_cast %56 : vector<1x4x254xf32> to vector<4x254xf32>
    %cst_31 = arith.constant 0.000000e+00 : f32
    %58 = vector.broadcast %cst_31 : f32 to vector<4x2xf32>
    %59 = tpu.concatenate %57, %58 in 1 : vector<4x254xf32>, vector<4x2xf32> -> vector<4x256xf32>
    %cst_32 = arith.constant 0.000000e+00 : f32
    %60 = vector.shape_cast %20 : vector<1x256xi1> to vector<1x256xi1>
    %61 = vector.broadcast %60 : vector<1x256xi1> to vector<4x256xi1>
    %62 = vector.broadcast %cst_32 : f32 to vector<4x256xf32>
    %63 = arith.select %61, %59, %62 : vector<4x256xi1>, vector<4x256xf32>
    %c20 = arith.constant 20 : index
    %c0_33 = arith.constant 0 : index
    %64 = vector.load %arg5[%c20, %c0_33] : memref<36x256xf32, #tpu.memory_space<vmem>>, vector<4x256xf32>
    tpu.vector_store %arg5[%c20, %c0_33], %63 {strides = array<i32>} : memref<36x256xf32, #tpu.memory_space<vmem>>, vector<4x256xf32>,
    %c0_34 = arith.constant 0 : index
    %c0_35 = arith.constant 0 : index
    %c30 = arith.constant 30 : index
    %65 = vector.load %arg1[%c0_34, %c0_35, %c30] : memref<1x4x256xf32, #tpu.memory_space<vmem>>, vector<1x4x226xf32>
    %66 = vector.shape_cast %65 : vector<1x4x226xf32> to vector<4x226xf32>
    %cst_36 = arith.constant 0.000000e+00 : f32
    %67 = vector.broadcast %cst_36 : f32 to vector<4x30xf32>
    %68 = tpu.concatenate %66, %67 in 1 : vector<4x226xf32>, vector<4x30xf32> -> vector<4x256xf32>
    %cst_37 = arith.constant 0.000000e+00 : f32
    %69 = vector.shape_cast %18 : vector<1x256xi1> to vector<1x256xi1>
    %70 = vector.broadcast %69 : vector<1x256xi1> to vector<4x256xi1>
    %71 = vector.broadcast %cst_37 : f32 to vector<4x256xf32>
    %72 = arith.select %70, %68, %71 : vector<4x256xi1>, vector<4x256xf32>
    %c24 = arith.constant 24 : index
    %c0_38 = arith.constant 0 : index
    %73 = vector.load %arg5[%c24, %c0_38] : memref<36x256xf32, #tpu.memory_space<vmem>>, vector<4x256xf32>
    tpu.vector_store %arg5[%c24, %c0_38], %72 {strides = array<i32>} : memref<36x256xf32, #tpu.memory_space<vmem>>, vector<4x256xf32>,
    %c0_39 = arith.constant 0 : index
    %c0_40 = arith.constant 0 : index
    %c32 = arith.constant 32 : index
    %74 = vector.load %arg1[%c0_39, %c0_40, %c32] : memref<1x4x256xf32, #tpu.memory_space<vmem>>, vector<1x4x224xf32>
    %75 = vector.shape_cast %74 : vector<1x4x224xf32> to vector<4x224xf32>
    %cst_41 = arith.constant 0.000000e+00 : f32
    %76 = vector.broadcast %cst_41 : f32 to vector<4x32xf32>
    %77 = tpu.concatenate %75, %76 in 1 : vector<4x224xf32>, vector<4x32xf32> -> vector<4x256xf32>
    %c28 = arith.constant 28 : index
    %c0_42 = arith.constant 0 : index
    %78 = vector.load %arg5[%c28, %c0_42] : memref<36x256xf32, #tpu.memory_space<vmem>>, vector<4x256xf32>
    tpu.vector_store %arg5[%c28, %c0_42], %77 {strides = array<i32>} : memref<36x256xf32, #tpu.memory_space<vmem>>, vector<4x256xf32>,
    %c0_43 = arith.constant 0 : index
    %c0_44 = arith.constant 0 : index
    %c34 = arith.constant 34 : index
    %79 = vector.load %arg1[%c0_43, %c0_44, %c34] : memref<1x4x256xf32, #tpu.memory_space<vmem>>, vector<1x4x222xf32>
    %80 = vector.shape_cast %79 : vector<1x4x222xf32> to vector<4x222xf32>
    %cst_45 = arith.constant 0.000000e+00 : f32
    %81 = vector.broadcast %cst_45 : f32 to vector<4x34xf32>
    %82 = tpu.concatenate %80, %81 in 1 : vector<4x222xf32>, vector<4x34xf32> -> vector<4x256xf32>
    %cst_46 = arith.constant 0.000000e+00 : f32
    %83 = vector.shape_cast %20 : vector<1x256xi1> to vector<1x256xi1>
    %84 = vector.broadcast %83 : vector<1x256xi1> to vector<4x256xi1>
    %85 = vector.broadcast %cst_46 : f32 to vector<4x256xf32>
    %86 = arith.select %84, %82, %85 : vector<4x256xi1>, vector<4x256xf32>
    %c32_47 = arith.constant 32 : index
    %c0_48 = arith.constant 0 : index
    %87 = vector.load %arg5[%c32_47, %c0_48] : memref<36x256xf32, #tpu.memory_space<vmem>>, vector<4x256xf32>
    tpu.vector_store %arg5[%c32_47, %c0_48], %86 {strides = array<i32>} : memref<36x256xf32, #tpu.memory_space<vmem>>, vector<4x256xf32>,
    %c0_49 = arith.constant 0 : index
    %c0_50 = arith.constant 0 : index
    %88 = vector.load %arg2[%c0_49, %c0_50] : memref<8x36xf32, #tpu.memory_space<vmem>>, vector<8x36xf32>
    %c0_51 = arith.constant 0 : index
    %c0_52 = arith.constant 0 : index
    %89 = vector.load %arg5[%c0_51, %c0_52] : memref<36x256xf32, #tpu.memory_space<vmem>>, vector<36x256xf32>
    %cst_53 = arith.constant dense<0.000000e+00> : vector<8x256xf32>
    %90 = tpu.matmul %88, %89, %cst_53 {dimension_numbers = #tpu.dot_dimension_numbers<[1], [0], [0], [1], [0, 0, 1, 1], [], []>} : vector<8x36xf32>, vector<36x256xf32>, vector<8x256xf32> -> vector<8x256xf32>
    %c0_54 = arith.constant 0 : index
    %c0_55 = arith.constant 0 : index
    %91 = vector.load %arg3[%c0_54, %c0_55] : memref<8x1xf32, #tpu.memory_space<vmem>>, vector<8x1xf32>
    %92 = vector.broadcast %91 : vector<8x1xf32> to vector<8x256xf32>
    %93 = arith.addf %90, %92 : vector<8x256xf32>
    %c0_56 = arith.constant 0 : index
    %c0_57 = arith.constant 0 : index
    %c0_58 = arith.constant 0 : index
    %94 = vector.load %arg4[%c0_56, %c0_57, %c0_58] : memref<1x8x256xf32, #tpu.memory_space<vmem>>, vector<1x8x256xf32>
    %95 = vector.shape_cast %94 : vector<1x8x256xf32> to vector<8x256xf32>
    %96 = vector.shape_cast %93 : vector<8x256xf32> to vector<1x8x256xf32>
    tpu.vector_store %arg4[%c0_56, %c0_57, %c0_58], %96 {strides = array<i32>} : memref<1x8x256xf32, #tpu.memory_space<vmem>>, vector<1x8x256xf32>,
    return
  }
  func.func @transform_0(%arg0: i32) -> (i32, i32, i32) {
    %c0_i32 = arith.constant 0 : i32
    %c0_i32_0 = arith.constant 0 : i32
    %c0_i32_1 = arith.constant 0 : i32
    return %arg0, %c0_i32, %c0_i32_0 : i32, i32, i32
  }
  func.func @transform_1(%arg0: i32) -> (i32, i32) {
    %c0_i32 = arith.constant 0 : i32
    %c0_i32_0 = arith.constant 0 : i32
    %c0_i32_1 = arith.constant 0 : i32
    return %c0_i32, %c0_i32_0 : i32, i32
  }
  func.func @transform_2(%arg0: i32) -> (i32, i32) {
    %c0_i32 = arith.constant 0 : i32
    %c0_i32_0 = arith.constant 0 : i32
    %c0_i32_1 = arith.constant 0 : i32
    return %c0_i32, %c0_i32_0 : i32, i32
  }
  func.func @transform_3(%arg0: i32) -> (i32, i32, i32) {
    %c0_i32 = arith.constant 0 : i32
    %c0_i32_0 = arith.constant 0 : i32
    %c0_i32_1 = arith.constant 0 : i32
    return %arg0, %c0_i32, %c0_i32_0 : i32, i32, i32
  }
}

</mosaic_0001>

<llo_original>
// kernel: tpu_custom_call.1
$region0: #{tpu_custom_call.1}
  #allocation0 [shape = 'u32[]', space=smem, size = 0x4, offset = 0x4, fixed_abs, tag = 'smem constant byte address 0x4 - core index']
  #allocation1 [shape = 'u32[72,128]{1,0:T(1,128)}', space=vmem, size = 0x9000, scoped, tag = 'internal scratch']
  #allocation2 [shape = 'f32[36,256]{1,0:T(8,128)}', space=vmem, size = 0xa000, scoped, tag = 'scratch operand']
  %s0 = inlined_call_operand.hbm [shape: f32[2,4,256], index: 0, kind: input, shape index: {}]
  %s1 = inlined_call_operand.vmem [shape: f32[8,36], index: 1, kind: input, shape index: {}]
  %s2 = inlined_call_operand.vmem [shape: f32[8,1], index: 2, kind: input, shape index: {}]
  %s3 = inlined_call_operand.hbm [shape: f32[2,8,256], index: 3, kind: output, shape index: {}]
  %s4 = sld [smem:[#allocation0]]
  $region49: #{tpu_custom_call.1} parent=0
    _
  %s6 = ssub.s32 1, %s4
  %s7 = scalar_select 0, %s6, %s4
  $region1: #{tpu_custom_call.1} parent=0
    #allocation3 [shape = 'u8[8192]{0}', space=vmem, size = 0x2000, scoped, tag = 'input window, operand 0']
    #allocation4 [shape = 's32[2]{0}', space=sflag, size = 0x8, scoped, tag = 'scoped memory for tpu_custom_call.1']
    #allocation5 [shape = 's32[2]{0}', space=sflag, size = 0x8, scoped, tag = 'scoped memory for tpu_custom_call.1']
    #allocation6 [shape = 'u8[16384]{0}', space=vmem, size = 0x4000, scoped, tag = 'output window, operand 0']
    %8 = vsyncpa [#allocation4], 0
    %s9 = scalar_lea.sflag [#allocation4], 1
    %10 = vsyncpa %s9, 0
    %11 = vsyncpa [#allocation5], 0
    %s12 = scalar_lea.sflag [#allocation5], 1
    %13 = vsyncpa %s12, 0
    loop: start=0, step=1, limit=4
    $region2: #{tpu_custom_call.1} parent=1 // loop_pre_header
      _
    $region3: #{tpu_custom_call.1} parent=1 // loop_header
      %s15 = sphi 0, %s19
      %p16 = scmp.ge.s32.totalorder %s15, 4
      %s25 = sphi 0, %s27
      %s28 = sphi 0, %s25
      %s29 = sphi 0, %s28
      %s45 = sphi 0, %s29
      %s49 = sphi 0, %s49
      %s51 = sphi 0, %s49
      %s52 = sphi 0, %s51
      %s66 = sphi 0, %s52
      %s70 = sphi 0, %s70
      %s72 = sphi 0, %s70
      %s73 = sphi 0, %s72
      %s87 = sphi 0, %s73
      %s93 = sphi 0, %s95
      %s96 = sphi 0, %s93
      %s97 = sphi 0, %s96
      %s113 = sphi 0, %s97
    $region4: #{tpu_custom_call.1} parent=1 // loop_header_branch
      %18 = sbr.rel (%p16) target = $region8
    $region5: #{tpu_custom_call.1} parent=1 // loop_body
      %s20 = ssub.s32 %s15, 1
      %s21 = ssub.s32 %s15, 2
      %s22 = sadd.s32 %s15, 1
      %s23 = ssub.s32 %s15, %s22
      %p24 = scmp.eq.s32.totalorder %s23, 0
      %s26 = sadd.s32 %s25, 1
      %s27 = scalar_select %p24, %s25, %s26
      %p30 = pneg %p24
      %p31 = scmp.eq.s32.totalorder %s15, 1
      %p32 = por %p30, %p31
      %p33 = scmp.ne.s32.totalorder %s25, %s28
      %p34 = scmp.eq.s32.totalorder %s15, 0
      %p35 = por %p33, %p34
      %p36 = scmp.ne.s32.totalorder %s25, %s28
      %p37 = scmp.eq.s32.totalorder %s20, 1
      %p38 = por %p36, %p37
      %p39 = scmp.ne.s32.totalorder %s28, %s29
      %p40 = scmp.eq.s32.totalorder %s20, 0
      %p41 = por %p39, %p40
      %p42 = scmp.ne.s32.totalorder %s28, %s29
      %p43 = scmp.eq.s32.totalorder %s21, 1
      %p44 = por %p42, %p43
      %p46 = scmp.ne.s32.totalorder %s29, %s45
      %p47 = scmp.eq.s32.totalorder %s21, 0
      %p48 = por %p46, %p47
      %s50 = sadd.s32 %s49, 1
      %p53 = scmp.eq.s32.totalorder %s15, 1
      %p54 = scmp.ne.s32.totalorder %s49, %s51
      %p55 = scmp.eq.s32.totalorder %s15, 0
      %p56 = por %p54, %p55
      %p57 = scmp.ne.s32.totalorder %s49, %s51
      %p58 = scmp.eq.s32.totalorder %s20, 1
      %p59 = por %p57, %p58
      %p60 = scmp.ne.s32.totalorder %s51, %s52
      %p61 = scmp.eq.s32.totalorder %s20, 0
      %p62 = por %p60, %p61
      %p63 = scmp.ne.s32.totalorder %s51, %s52
      %p64 = scmp.eq.s32.totalorder %s21, 1
      %p65 = por %p63, %p64
      %p67 = scmp.ne.s32.totalorder %s52, %s66
      %p68 = scmp.eq.s32.totalorder %s21, 0
      %p69 = por %p67, %p68
      %s71 = sadd.s32 %s70, 1
      %p74 = scmp.eq.s32.totalorder %s15, 1
      %p75 = scmp.ne.s32.totalorder %s70, %s72
      %p76 = scmp.eq.s32.totalorder %s15, 0
      %p77 = por %p75, %p76
      %p78 = scmp.ne.s32.totalorder %s70, %s72
      %p79 = scmp.eq.s32.totalorder %s20, 1
      %p80 = por %p78, %p79
      %p81 = scmp.ne.s32.totalorder %s72, %s73
      %p82 = scmp.eq.s32.totalorder %s20, 0
      %p83 = por %p81, %p82
      %p84 = scmp.ne.s32.totalorder %s72, %s73
      %p85 = scmp.eq.s32.totalorder %s21, 1
      %p86 = por %p84, %p85
      %p88 = scmp.ne.s32.totalorder %s73, %s87
      %p89 = scmp.eq.s32.totalorder %s21, 0
      %p90 = por %p88, %p89
      %s91 = ssub.s32 %s15, %s22
      %p92 = scmp.eq.s32.totalorder %s91, 0
      %s94 = sadd.s32 %s93, 1
      %s95 = scalar_select %p92, %s93, %s94
      %p98 = pneg %p92
      %p99 = scmp.eq.s32.totalorder %s15, 1
      %p100 = por %p98, %p99
      %p101 = scmp.ne.s32.totalorder %s93, %s96
      %p102 = scmp.eq.s32.totalorder %s15, 0
      %p103 = por %p101, %p102
      %p104 = scmp.ne.s32.totalorder %s93, %s96
      %p105 = scmp.eq.s32.totalorder %s20, 1
      %p106 = por %p104, %p105
      %p107 = scmp.ne.s32.totalorder %s96, %s97
      %p108 = scmp.eq.s32.totalorder %s20, 0
      %p109 = por %p107, %p108
      %p110 = scmp.ne.s32.totalorder %s96, %s97
      %p111 = scmp.eq.s32.totalorder %s21, 1
      %p112 = por %p110, %p111
      %p114 = scmp.ne.s32.totalorder %s97, %s113
      %p115 = scmp.eq.s32.totalorder %s21, 0
      %p116 = por %p114, %p115
      %p117 = scmp.le.s32.totalorder 1, %s15
      %p118 = scmp.lt.s32.totalorder %s15, 3
      %p119 = pnand %p117, %p118
      %p120 = pneg %p119
      // Predicated region
      $region9: #{tpu_custom_call.1} parent=5 // pred_check
        _
      $region10: #{tpu_custom_call.1} parent=5 // pred_check_branch
        %122 = sbr.rel (%p119) target = $region12
      $region11: #{tpu_custom_call.1} parent=5 // pred_region
        %s123 = ssub.s32 %s15, 1
        // Predicated region
        $region13: #{tpu_custom_call.1} parent=11 // pred_check
          %p124 = pneg %p62
        $region14: #{tpu_custom_call.1} parent=11 // pred_check_branch
          %126 = sbr.rel (%p124) target = $region16
        $region15: #{tpu_custom_call.1} parent=11 // pred_region
          _
        $region16: #{tpu_custom_call.1} parent=11 // pred_fallthru
          _
        // Predicated region
        $region17: #{tpu_custom_call.1} parent=11 // pred_check
          %p127 = pneg %p83
        $region18: #{tpu_custom_call.1} parent=11 // pred_check_branch
          %129 = sbr.rel (%p127) target = $region20
        $region19: #{tpu_custom_call.1} parent=11 // pred_region
          _
        $region20: #{tpu_custom_call.1} parent=11 // pred_fallthru
          _
      $region12: #{tpu_custom_call.1} parent=5 // pred_fallthru
        _
      %p130 = scmp.lt.s32.totalorder %s15, 2
      // Predicated region
      $region21: #{tpu_custom_call.1} parent=5 // pred_check
        %p131 = pneg %p130
      $region22: #{tpu_custom_call.1} parent=5 // pred_check_branch
        %133 = sbr.rel (%p131) target = $region24
      $region23: #{tpu_custom_call.1} parent=5 // pred_region
        // Predicated region
        $region25: #{tpu_custom_call.1} parent=23 // pred_check
          %p134 = pneg %p35
        $region26: #{tpu_custom_call.1} parent=23 // pred_check_branch
          %136 = sbr.rel (%p134) target = $region28
        $region27: #{tpu_custom_call.1} parent=23 // pred_region
          %s137 = sand.u32 %s25, 1
          %s138 = scalar_lea.sflag [#allocation4], %s137
          %s139 = sand.u32 %s25, 1
          %s140 = smul.addr %s139, 8
          %s141 = scalar_lea.vmem [#allocation3], %s140
          %143 = vsyncadd %s138, 0
          %s144 = smul.addr %s15, 2
          %s145 = smul.addr %s144, 4
          %s146 = scalar_lea.hbm %s0, %s145
          %s148 = sshll.u32 %s146, 4
          %s149 = int_to_ptr.hbm [resolvable:$true] %s148
          %s150 = sshll.u32 %s141, 4
          %s151 = int_to_ptr.vmem [resolvable:$true] %s150
          %153 = dma.hbm_to_vmem [thread:$0]  %s149, 128, %s151, %s138
        $region28: #{tpu_custom_call.1} parent=23 // pred_fallthru
          _
      $region24: #{tpu_custom_call.1} parent=5 // pred_fallthru
        _
      %p154 = scmp.le.s32.totalorder 1, %s15
      %p155 = scmp.lt.s32.totalorder %s15, 3
      %p156 = pnand %p154, %p155
      %p157 = pneg %p156
      // Predicated region
      $region29: #{tpu_custom_call.1} parent=5 // pred_check
        _
      $region30: #{tpu_custom_call.1} parent=5 // pred_check_branch
        %159 = sbr.rel (%p156) target = $region32
      $region31: #{tpu_custom_call.1} parent=5 // pred_region
        %s160 = ssub.s32 %s15, 1
        %s161 = sand.u32 %s28, 1
        %s162 = scalar_lea.sflag [#allocation4], %s161
        %s163 = sand.u32 %s28, 1
        %s164 = smul.addr %s163, 8
        %s165 = scalar_lea.vmem [#allocation3], %s164
        // Predicated region
        $region33: #{tpu_custom_call.1} parent=31 // pred_check
          %p166 = pneg %p41
        $region34: #{tpu_custom_call.1} parent=31 // pred_check_branch
          %168 = sbr.rel (%p166) target = $region36
        $region35: #{tpu_custom_call.1} parent=31 // pred_region
          %170 = dma.done %s162, 128
        $region36: #{tpu_custom_call.1} parent=31 // pred_fallthru
          _
        %s171 = sand.u32 %s28, 1
        %s172 = scalar_lea.sflag [#allocation4], %s171
        %s173 = sand.u32 %s28, 1
        %s174 = smul.addr %s173, 8
        %s175 = scalar_lea.vmem [#allocation3], %s174
        %p176 = pneg %p41
        %p177 = pneg %p38
        %p178 = pneg %p62
        %p179 = pneg %p59
        %p180 = pneg %p83
        %p181 = pneg %p80
        %p182 = pneg %p109
        %p183 = pneg %p106
        %s184 = sand.u32 %s96, 1
        %s185 = scalar_lea.sflag [#allocation5], %s184
        %s186 = sand.u32 %s96, 1
        %s187 = smul.addr %s186, 16
        %s188 = scalar_lea.vmem [#allocation6], %s187
        %v189 = vlaneseq
        %v190 = vand.u32 %v189, 127
        %v191 = vadd.s32 %v190, 128
        %vm192 = vcmp.lt.s32.totalorder %v190, 0
        %v193 = vsub.s32 0, %v190
        %v194 = vsel %vm192, %v193, %v190
        %v195 = vshrl.u32 %v194, 4
        %v196 = vand.u32 %v194, 15
        %v197 = vsub.s32 0, %v196
        %v198 = vsel %vm192, %v197, %v196
        %vm199 = vcmp.lt.s32.totalorder %v191, 0
        %v200 = vsub.s32 0, %v191
        %v201 = vsel %vm199, %v200, %v191
        %v202 = vshrl.u32 %v201, 4
        %v203 = vand.u32 %v201, 15
        %v204 = vsub.s32 0, %v203
        %v205 = vsel %vm199, %v204, %v203
        %vm206 = vcmp.ne.s32.totalorder %v198, 0
        %vm207 = vcmp.ne.s32.totalorder %v205, 0
        %vm208 = vcmp.lt.s32.totalorder %v198, 0
        %vm209 = vcmp.lt.s32.totalorder %v205, 0
        %vm210 = vmand %vm208, %vm206
        %vm211 = vmand %vm209, %vm207
        %v212 = vadd.s32 %v198, 16
        %v213 = vadd.s32 %v205, 16
        %v214 = vsel %vm210, %v212, %v198
        %v215 = vsel %vm211, %v213, %v205
        %vm216 = vcmp.ge.s32.totalorder %v214, 2
        %vm217 = vcmp.ge.s32.totalorder %v215, 2
        %vm218 = vcmp.lt.s32.totalorder %v214, 14
        %vm219 = vcmp.lt.s32.totalorder %v215, 14
        %v220 = vld [vmem:[%s165] sm:$0xff]
        %222 = vst [vmem:[#allocation1] ss:$2 sm:$0xff] %v220
        %v223 = vld.sshfl [vmem:[#allocation1] sm:$0xff pattern:$0x75316420]
        %v224 = vld.sshfl [vmem:[#allocation1 + $0x8] sm:$0xff pattern:$0x75316420]
        %225 = vrot.lane.b32.xlu0 %v223, 34
        %v226 = vpop.permute.xlu0 %225
        %227 = vrot.lane.b32.xlu0 %v224, 34
        %v228 = vpop.permute.xlu0 %227
        %vm229 = vcmask 277504
        %v230 = vsel %vm229, %v226, %v228
        %v233 = vsel %vm229, 0.0, %v226
        %v234 = vsel %vm216, 1, 0
        %v235 = vsel %vm217, 1, 0
        %vm236 = vcmp.eq.s32.totalorder %v234, 1
        %vm237 = vcmp.eq.s32.totalorder %v235, 1
        %v238 = vsel %vm236, %v233, 0.0
        %v239 = vsel %vm237, %v230, 0.0
        %240 = vst [vmem:[#allocation2] sm:$0xf] %v238
        %241 = vst [vmem:[#allocation2 + $0x8] sm:$0xf] %v239
        %v242 = vld [vmem:[%s165] sm:$0xff]
        %244 = vst [vmem:[#allocation1] ss:$2 sm:$0xff] %v242
        %v245 = vld.sshfl [vmem:[#allocation1] sm:$0xff pattern:$0x75316420]
        %v246 = vld.sshfl [vmem:[#allocation1 + $0x8] sm:$0xff pattern:$0x75316420]
        %247 = vrot.lane.b32.xlu0 %v245, 32
        %v248 = vpop.permute.xlu0 %247
        %249 = vrot.lane.b32.xlu0 %v246, 32
        %v250 = vpop.permute.xlu0 %249
        %vm251 = vcmask 261120
        %v252 = vsel %vm251, %v248, %v250
        %v254 = vsel %vm251, 0.0, %v248
        %v256 = vrot.slane %v254, 4
        %v257 = vrot.slane %v252, 4
        %260 = vst [vmem:[#allocation2] sm:$0xf0] %v256
        %261 = vst [vmem:[#allocation2 + $0x8] sm:$0xf0] %v257
        %v262 = vld [vmem:[%s165] sm:$0xff]
        %264 = vst [vmem:[#allocation1] ss:$2 sm:$0xff] %v262
        %v265 = vld.sshfl [vmem:[#allocation1] sm:$0xff pattern:$0x75316420]
        %v266 = vld.sshfl [vmem:[#allocation1 + $0x8] sm:$0xff pattern:$0x75316420]
        %267 = vrot.lane.b32.xlu0 %v265, 30
        %v268 = vpop.permute.xlu0 %267
        %269 = vrot.lane.b32.xlu0 %v266, 30
        %v270 = vpop.permute.xlu0 %269
        %vm271 = vcmask 244736
        %v272 = vsel %vm271, %v268, %v270
        %v275 = vsel %vm271, 0.0, %v268
        %v276 = vsel %vm218, 1, 0
        %v277 = vsel %vm219, 1, 0
        %vm278 = vcmp.eq.s32.totalorder %v276, 1
        %vm279 = vcmp.eq.s32.totalorder %v277, 1
        %v280 = vsel %vm278, %v275, 0.0
        %v281 = vsel %vm279, %v272, 0.0
        %282 = vst [vmem:[#allocation2 + $0x10] sm:$0xf] %v280
        %283 = vst [vmem:[#allocation2 + $0x18] sm:$0xf] %v281
        %v284 = vld [vmem:[%s165] sm:$0xff]
        %286 = vst [vmem:[#allocation1] ss:$2 sm:$0xff] %v284
        %v287 = vld.sshfl [vmem:[#allocation1] sm:$0xff pattern:$0x75316420]
        %v288 = vld.sshfl [vmem:[#allocation1 + $0x8] sm:$0xff pattern:$0x75316420]
        %289 = vrot.lane.b32.xlu0 %v287, 2
        %v290 = vpop.permute.xlu0 %289
        %291 = vrot.lane.b32.xlu0 %v288, 2
        %v292 = vpop.permute.xlu0 %291
        %vm293 = vcmask 15360
        %v294 = vsel %vm293, %v290, %v292
        %v297 = vsel %vm293, 0.0, %v290
        %v298 = vsel %vm236, %v297, 0.0
        %v299 = vsel %vm237, %v294, 0.0
        %v302 = vrot.slane %v298, 4
        %v303 = vrot.slane %v299, 4
        %306 = vst [vmem:[#allocation2 + $0x10] sm:$0xf0] %v302
        %307 = vst [vmem:[#allocation2 + $0x18] sm:$0xf0] %v303
        %v308 = vld [vmem:[%s165] sm:$0xff]
        %310 = vst [vmem:[#allocation1] ss:$2 sm:$0xff] %v308
        %v311 = vld.sshfl [vmem:[#allocation1] sm:$0xff pattern:$0x75316420]
        %v312 = vld.sshfl [vmem:[#allocation1 + $0x8] sm:$0xff pattern:$0x75316420]
        %315 = vst [vmem:[#allocation2 + $0x20] sm:$0xf] %v311
        %316 = vst [vmem:[#allocation2 + $0x28] sm:$0xf] %v312
        %v317 = vld [vmem:[%s165] sm:$0xff]
        %319 = vst [vmem:[#allocation1] ss:$2 sm:$0xff] %v317
        %v320 = vld.sshfl [vmem:[#allocation1] sm:$0xff pattern:$0x75316420]
        %v321 = vld.sshfl [vmem:[#allocation1 + $0x8] sm:$0xff pattern:$0x75316420]
        %322 = vrot.lane.b32.xlu0 %v320, 126
        %v323 = vpop.permute.xlu0 %322
        %324 = vrot.lane.b32.xlu0 %v321, 126
        %v325 = vpop.permute.xlu0 %324
        %vm326 = vcmask 1031168
        %v327 = vsel %vm326, %v323, %v325
        %v330 = vsel %vm326, %v325, 0.0
        %v331 = vsel %vm278, %v327, 0.0
        %v332 = vsel %vm279, %v330, 0.0
        %v335 = vrot.slane %v331, 4
        %v336 = vrot.slane %v332, 4
        %339 = vst [vmem:[#allocation2 + $0x20] sm:$0xf0] %v335
        %340 = vst [vmem:[#allocation2 + $0x28] sm:$0xf0] %v336
        %v341 = vld [vmem:[%s165] sm:$0xff]
        %343 = vst [vmem:[#allocation1] ss:$2 sm:$0xff] %v341
        %v344 = vld.sshfl [vmem:[#allocation1] sm:$0xff pattern:$0x75316420]
        %v345 = vld.sshfl [vmem:[#allocation1 + $0x8] sm:$0xff pattern:$0x75316420]
        %346 = vrot.lane.b32.xlu0 %v344, 98
        %v347 = vpop.permute.xlu0 %346
        %348 = vrot.lane.b32.xlu0 %v345, 98
        %v349 = vpop.permute.xlu0 %348
        %vm350 = vcmask 801792
        %v351 = vsel %vm350, %v347, %v349
        %v354 = vsel %vm350, %v349, 0.0
        %v355 = vsel %vm236, %v351, 0.0
        %v356 = vsel %vm237, %v354, 0.0
        %357 = vst [vmem:[#allocation2 + $0x30] sm:$0xf] %v355
        %358 = vst [vmem:[#allocation2 + $0x38] sm:$0xf] %v356
        %v359 = vld [vmem:[%s165] sm:$0xff]
        %361 = vst [vmem:[#allocation1] ss:$2 sm:$0xff] %v359
        %v362 = vld.sshfl [vmem:[#allocation1] sm:$0xff pattern:$0x75316420]
        %v363 = vld.sshfl [vmem:[#allocation1 + $0x8] sm:$0xff pattern:$0x75316420]
        %364 = vrot.lane.b32.xlu0 %v362, 96
        %v365 = vpop.permute.xlu0 %364
        %366 = vrot.lane.b32.xlu0 %v363, 96
        %v367 = vpop.permute.xlu0 %366
        %vm368 = vcmask 785408
        %v369 = vsel %vm368, %v365, %v367
        %v371 = vsel %vm368, %v367, 0.0
        %v373 = vrot.slane %v369, 4
        %v374 = vrot.slane %v371, 4
        %377 = vst [vmem:[#allocation2 + $0x30] sm:$0xf0] %v373
        %378 = vst [vmem:[#allocation2 + $0x38] sm:$0xf0] %v374
        %v379 = vld [vmem:[%s165] sm:$0xff]
        %381 = vst [vmem:[#allocation1] ss:$2 sm:$0xff] %v379
        %v382 = vld.sshfl [vmem:[#allocation1] sm:$0xff pattern:$0x75316420]
        %v383 = vld.sshfl [vmem:[#allocation1 + $0x8] sm:$0xff pattern:$0x75316420]
        %384 = vrot.lane.b32.xlu0 %v382, 94
        %v385 = vpop.permute.xlu0 %384
        %386 = vrot.lane.b32.xlu0 %v383, 94
        %v387 = vpop.permute.xlu0 %386
        %vm388 = vcmask 769024
        %v389 = vsel %vm388, %v385, %v387
        %v392 = vsel %vm388, %v387, 0.0
        %v393 = vsel %vm278, %v389, 0.0
        %v394 = vsel %vm279, %v392, 0.0
        %395 = vst [vmem:[#allocation2 + $0x40] sm:$0xf] %v393
        %396 = vst [vmem:[#allocation2 + $0x48] sm:$0xf] %v394
        %v397 = vld [vmem:[%s1] sm:$0xff]
        %v398 = vld [vmem:[#allocation2] sm:$0xff]
        %v399 = vld [vmem:[#allocation2 + $0x8] sm:$0xff]
        %v400 = vld [vmem:[#allocation2 + $0x10] sm:$0xff]
        %v401 = vld [vmem:[#allocation2 + $0x18] sm:$0xff]
        %v402 = vld [vmem:[#allocation2 + $0x20] sm:$0xff]
        %v403 = vld [vmem:[#allocation2 + $0x28] sm:$0xff]
        %v404 = vld [vmem:[#allocation2 + $0x30] sm:$0xff]
        %v405 = vld [vmem:[#allocation2 + $0x38] sm:$0xff]
        %v406 = vld [vmem:[#allocation2 + $0x40] sm:$0xf]
        %v407 = vld [vmem:[#allocation2 + $0x48] sm:$0xf]
        %v408 = vld [vmem:[%s2] sm:$0xff]
        %410 = vset.pattern.permute.xlu0 0
        %411 = vperm.xlu0 %410, %v408
        %v412 = vpop.permute.xlu0 %411
        %vm414 = vcmask 293888
        %v416 = vsel %vm414, %v397, 0
        %vm418 = vcmask 1043456
        %v420 = vsel %vm418, %v406, 0
        %v423 = vsel %vm418, %v407, 0
        %425 = vmatpush.msra.mxu0 0.0
        %426 = vmatpush.msra.mxu0 0.0
        %427 = vmatpush.msra.mxu0 0.0
        %428 = vmatpush.msra.mxu0 0.0
        %429 = vmatpush.msra.mxu0 0.0
        %430 = vmatpush.msra.mxu0 0.0
        %431 = vmatpush.msra.mxu0 0.0
        %432 = vmatpush.msra.mxu0 0.0
        %433 = vmatpush.msra.mxu0 0.0
        %434 = vmatpush.msra.mxu0 0.0
        %435 = vmatpush.msra.mxu0 0.0
        %436 = vmatpush.msra.mxu0 %v420
        %437 = vmatpush.msra.mxu0 %v404
        %438 = vmatpush.msra.mxu0 %v402
        %439 = vmatpush.msra.mxu0 %v400
        %440 = vmatpush.msra.mxu0 %v398
        %441 = vmatmul.f32.gmra.mxu0 %v416
        %v442 = vpop.f32.mrf.mxu0
        %v443 = vadd.f32 %v412, %v442
        %444 = vdwg.mxu0
        %445 = vmatpush.msra.mxu0 0.0
        %446 = vmatpush.msra.mxu0 0.0
        %447 = vmatpush.msra.mxu0 0.0
        %448 = vmatpush.msra.mxu0 0.0
        %449 = vmatpush.msra.mxu0 0.0
        %450 = vmatpush.msra.mxu0 0.0
        %451 = vmatpush.msra.mxu0 0.0
        %452 = vmatpush.msra.mxu0 0.0
        %453 = vmatpush.msra.mxu0 0.0
        %454 = vmatpush.msra.mxu0 0.0
        %455 = vmatpush.msra.mxu0 0.0
        %456 = vmatpush.msra.mxu0 %v423
        %457 = vmatpush.msra.mxu0 %v405
        %458 = vmatpush.msra.mxu0 %v403
        %459 = vmatpush.msra.mxu0 %v401
        %460 = vmatpush.msra.mxu0 %v399
        %461 = vmatmul.f32.gmra.mxu0 %v416
        %v462 = vpop.f32.mrf.mxu0
        %v463 = vadd.f32 %v412, %v462
        %464 = vdwg.mxu0
        %465 = vst [vmem:[%s188] sm:$0xff] %v443
        %466 = vst [vmem:[%s188 + $0x8] sm:$0xff] %v463
        %s467 = sand.u32 %s96, 1
        %s468 = scalar_lea.sflag [#allocation5], %s467
        %s469 = sand.u32 %s96, 1
        %s470 = smul.addr %s469, 16
        %s471 = scalar_lea.vmem [#allocation6], %s470
        // Predicated region
        $region37: #{tpu_custom_call.1} parent=31 // pred_check
          %p472 = pneg %p106
        $region38: #{tpu_custom_call.1} parent=31 // pred_check_branch
          %474 = sbr.rel (%p472) target = $region40
        $region39: #{tpu_custom_call.1} parent=31 // pred_region
          %476 = vsyncadd %s468, 0
          %s477 = smul.addr %s20, 2
          %s478 = smul.addr %s477, 8
          %s479 = scalar_lea.hbm %s3, %s478
          %s481 = sshll.u32 %s471, 4
          %s482 = int_to_ptr.vmem [resolvable:$true] %s481
          %s483 = sshll.u32 %s479, 4
          %s484 = int_to_ptr.hbm [resolvable:$true] %s483
          %486 = dma.vmem_to_hbm [thread:$0]  %s482, 256, %s484, %s468
        $region40: #{tpu_custom_call.1} parent=31 // pred_fallthru
          _
      $region32: #{tpu_custom_call.1} parent=5 // pred_fallthru
        _
      %p487 = scmp.le.s32.totalorder 2, %s15
      // Predicated region
      $region41: #{tpu_custom_call.1} parent=5 // pred_check
        %p488 = pneg %p487
      $region42: #{tpu_custom_call.1} parent=5 // pred_check_branch
        %490 = sbr.rel (%p488) target = $region44
      $region43: #{tpu_custom_call.1} parent=5 // pred_region
        %s491 = ssub.s32 %s15, 2
        // Predicated region
        $region45: #{tpu_custom_call.1} parent=43 // pred_check
          %p492 = pneg %p112
        $region46: #{tpu_custom_call.1} parent=43 // pred_check_branch
          %494 = sbr.rel (%p492) target = $region48
        $region47: #{tpu_custom_call.1} parent=43 // pred_region
          %s495 = sand.u32 %s97, 1
          %s496 = scalar_lea.sflag [#allocation5], %s495
          %s497 = sand.u32 %s97, 1
          %s498 = smul.addr %s497, 16
          %s499 = scalar_lea.vmem [#allocation6], %s498
          %501 = dma.done %s496, 256
        $region48: #{tpu_custom_call.1} parent=43 // pred_fallthru
          _
      $region44: #{tpu_custom_call.1} parent=5 // pred_fallthru
        _
    $region6: #{tpu_custom_call.1} parent=1 // loop_footer
      %s19 = sadd.s32 1, %s15
    $region7: #{tpu_custom_call.1} parent=1 // loop_footer_branch
      %14 = sbr.rel target = $region3
    $region8: #{tpu_custom_call.1} parent=1 // loop_exit
      _
    %502 = vsyncpa [#allocation4], 1
    %s503 = scalar_lea.sflag [#allocation4], 1
    %504 = vsyncpa %s503, 1
    %505 = vsyncpa [#allocation5], 1
    %s506 = scalar_lea.sflag [#allocation5], 1
    %507 = vsyncpa %s506, 1

</llo_original>
